<compile_context>
chip_gen: v7x
topology: tpu7x:2x2x1
jax: 0.10.0
libtpu: 0.0.40
codegen_flags: <defaults>
</compile_context>

<pallas_src>
import jax
import jax.numpy as jnp
from jax.experimental import pallas as pl
from jax.experimental.pallas import tpu as pltpu

# Problem sizes fixed by the PyTorch module.
N, C, H, W = 3, 49, 9, 9
KH, KW = 3, 3
PAD = 16
OH = H + 2 * PAD - KH + 1            # 39
OW = W + 2 * PAD - KW + 1            # 39

PAD_IN = KH - 1                      # 2  : only padding that can touch real data
HP = H + 2 * PAD_IN                  # 13
WP = W + 2 * PAD_IN                  # 13
VH = HP - KH + 1                     # 11 : valid (non-constant) output rows
VW = WP - KW + 1                     # 11 : valid (non-constant) output cols
OFF = PAD - (KH - 1)                 # 14 : valid window offset inside 39x39 output
K = C * KH * KW                      # 441: im2col contraction length
NVV = N * VH * VW                    # 363: flattened live output positions
LANES = 384                          # NVV padded to a multiple of 128 (lane-dense)

# TODO(synk): the PyTorch module never assigns self.negative_slope in __init__;
# we treat it as a fixed scalar hyper-parameter (0.01).
NEG_SLOPE = 0.01


def conv_fused_kernel(wt_ref, cols_ref, b_ref, out_ref):
    # wt_ref  : (1, K)      VMEM   (flattened conv weight, c-major then kh, kw)
    # cols_ref: (K, LANES)  VMEM   (im2col patches, live outputs on lanes)
    # b_ref   : (1,)        SMEM   (bias scalar)
    # out_ref : (1, LANES)  VMEM   (fused output, lane-dense)
    s = jnp.dot(wt_ref[...], cols_ref[...],
                preferred_element_type=jnp.float32)          # (1, LANES) on the MXU
    # Fused epilogue: bias + relu, * negative_slope, - 0.001, relu.
    z = jnp.maximum(s + b_ref[0], 0.0)
    out_ref[...] = jnp.maximum(z * NEG_SLOPE - 0.001, 0.0)   # one full-width store


def model_forward(x, weight, bias):
    """x: (N, C, H, W) f32; weight: (1, C, KH, KW); bias: (1,). Returns (N, 1, OH, OW)."""
    # Layout plumbing (tiny, done once in XLA): pad spatially by 2, then im2col
    # with row ordering (c, kh, kw) to match weight.reshape(K).
    xpad = jnp.pad(x, ((0, 0), (0, 0), (PAD_IN, PAD_IN), (PAD_IN, PAD_IN)))  # (N,C,13,13)
    patches = [xpad[:, :, kh:kh + VH, kw:kw + VW]
               for kh in range(KH) for kw in range(KW)]          # 9 x (N, C, 11, 11)
    cols = jnp.stack(patches, axis=2)                             # (N, C, 9, 11, 11)
    cols = jnp.transpose(cols, (1, 2, 0, 3, 4)).reshape(K, NVV)   # (441, 363)
    cols = jnp.pad(cols, ((0, 0), (0, LANES - NVV)))              # (441, 384)
    wt = weight.reshape(1, K)                                     # (1, 441)

    flat = pl.pallas_call(
        conv_fused_kernel,
        out_shape=jax.ShapeDtypeStruct((1, LANES), jnp.float32),
        grid_spec=pltpu.PrefetchScalarGridSpec(
            num_scalar_prefetch=0,
            grid=(1,),
            in_specs=[
                pl.BlockSpec((1, K), lambda i: (0, 0)),
                pl.BlockSpec((K, LANES), lambda i: (0, 0)),
                pl.BlockSpec(memory_space=pltpu.MemorySpace.SMEM),
            ],
            out_specs=pl.BlockSpec((1, LANES), lambda i: (0, 0)),
        ),
        compiler_params=pltpu.CompilerParams(
            dimension_semantics=("arbitrary",)),
    )(wt, cols, bias)                                             # (1, 384)

    # Everywhere outside the 11x11 window the conv is exactly zero -> constant.
    valid = flat[0, :NVV].reshape(N, VH, VW)                      # (3, 11, 11)
    fill = jnp.maximum(jnp.maximum(bias[0], 0.0) * NEG_SLOPE - 0.001, 0.0)
    out = jnp.pad(valid,
                  ((0, 0), (OFF, OH - OFF - VH), (OFF, OW - OFF - VW)),
                  constant_values=fill)                           # (3, 39, 39)
    return out[:, None, :, :]


def model_reference(x, weight, bias):
    y = jax.lax.conv_general_dilated(
        x, weight, window_strides=(1, 1),
        padding=((PAD, PAD), (PAD, PAD)),
        dimension_numbers=("NCHW", "OIHW", "NCHW"),
        precision=jax.lax.Precision.HIGHEST)
    y = y + bias.reshape(1, -1, 1, 1)
    z = jnp.maximum(y, 0.0)
    u = z * NEG_SLOPE
    v = u - 0.001
    return jnp.maximum(v, 0.0)


if __name__ == "__main__":
    key = jax.random.PRNGKey(0)
    kx, kwgt, kb = jax.random.split(key, 3)
    x = jax.random.normal(kx, (N, C, H, W), dtype=jnp.float32)
    # Deterministic parameter init (Conv2d(49, 1, 3) shapes).
    fan_in = C * KH * KW
    bound = 1.0 / (fan_in ** 0.5)
    weight = jax.random.uniform(kwgt, (1, C, KH, KW), jnp.float32, -bound, bound)
    bias = jax.random.uniform(kb, (1,), jnp.float32, -bound, bound)

    out = jax.block_until_ready(model_forward(x, weight, bias))
    ref = jax.block_until_ready(model_reference(x, weight, bias))

    assert out.shape == (N, 1, OH, OW), out.shape
    max_err = float(jnp.max(jnp.abs(out - ref)))
    assert jnp.allclose(out, ref, atol=2e-4, rtol=1e-4), max_err
    print("KERNEL_OK")
</pallas_src>

<mosaic_0001>
module attributes {stable_mosaic.version = 11 : i64} {
  func.func @conv_fused_kernel(%arg0: i32, %arg1: memref<1x441xf32, #tpu.memory_space<vmem>>, %arg2: memref<441x384xf32, #tpu.memory_space<vmem>>, %arg3: memref<1xf32, #tpu.memory_space<smem>>, %arg4: memref<1x384xf32, #tpu.memory_space<vmem>>) attributes {dimension_semantics = [#tpu.dimension_semantics<arbitrary>], iteration_bounds = array<i64: 1>, scalar_prefetch = 0 : i64, scratch_operands = 0 : i64, tpu.core_type = #tpu.core_type<tc>, window_params = [{pipeline_mode = #tpu.pipeline_mode<synchronous>, transform_indices = @transform_0, window_bounds = array<i64: 1, 441>}, {pipeline_mode = #tpu.pipeline_mode<synchronous>, transform_indices = @transform_1, window_bounds = array<i64: 441, 384>}, {transform_indices = @transform_2, window_bounds = array<i64: 1>}, {pipeline_mode = #tpu.pipeline_mode<synchronous>, transform_indices = @transform_3, window_bounds = array<i64: 1, 384>}]} {
    %c0 = arith.constant 0 : index
    %c0_0 = arith.constant 0 : index
    %0 = vector.load %arg1[%c0, %c0_0] : memref<1x441xf32, #tpu.memory_space<vmem>>, vector<1x441xf32>
    %c0_1 = arith.constant 0 : index
    %c0_2 = arith.constant 0 : index
    %1 = vector.load %arg2[%c0_1, %c0_2] : memref<441x384xf32, #tpu.memory_space<vmem>>, vector<441x384xf32>
    %cst = arith.constant dense<0.000000e+00> : vector<1x384xf32>
    %2 = tpu.matmul %0, %1, %cst {dimension_numbers = #tpu.dot_dimension_numbers<[1], [0], [0], [1], [0, 0, 1, 1], [], []>} : vector<1x441xf32>, vector<441x384xf32>, vector<1x384xf32> -> vector<1x384xf32>
    %c0_3 = arith.constant 0 : index
    %3 = memref.load %arg3[%c0_3] : memref<1xf32, #tpu.memory_space<smem>>
    %4 = vector.broadcast %3 : f32 to vector<1x384xf32>
    %5 = arith.addf %2, %4 : vector<1x384xf32>
    %cst_4 = arith.constant 0.000000e+00 : f32
    %6 = vector.broadcast %cst_4 : f32 to vector<1x384xf32>
    %7 = arith.maximumf %5, %6 : vector<1x384xf32>
    %cst_5 = arith.constant 0.00999999977 : f32
    %8 = vector.broadcast %cst_5 : f32 to vector<1x384xf32>
    %9 = arith.mulf %7, %8 : vector<1x384xf32>
    %cst_6 = arith.constant 1.000000e-03 : f32
    %10 = vector.broadcast %cst_6 : f32 to vector<1x384xf32>
    %11 = arith.subf %9, %10 : vector<1x384xf32>
    %cst_7 = arith.constant 0.000000e+00 : f32
    %12 = vector.broadcast %cst_7 : f32 to vector<1x384xf32>
    %13 = arith.maximumf %11, %12 : vector<1x384xf32>
    %c0_8 = arith.constant 0 : index
    %c0_9 = arith.constant 0 : index
    %14 = vector.load %arg4[%c0_8, %c0_9] : memref<1x384xf32, #tpu.memory_space<vmem>>, vector<1x384xf32>
    tpu.vector_store %arg4[%c0_8, %c0_9], %13 {strides = array<i32>} : memref<1x384xf32, #tpu.memory_space<vmem>>, vector<1x384xf32>,
    return
  }
  func.func @transform_0(%arg0: i32) -> (i32, i32) {
    %c0_i32 = arith.constant 0 : i32
    %c0_i32_0 = arith.constant 0 : i32
    %c0_i32_1 = arith.constant 0 : i32
    return %c0_i32, %c0_i32_0 : i32, i32
  }
  func.func @transform_1(%arg0: i32) -> (i32, i32) {
    %c0_i32 = arith.constant 0 : i32
    %c0_i32_0 = arith.constant 0 : i32
    %c0_i32_1 = arith.constant 0 : i32
    return %c0_i32, %c0_i32_0 : i32, i32
  }
  func.func @transform_2(%arg0: i32) -> i32 {
    %c0_i32 = arith.constant 0 : i32
    %c0_i32_0 = arith.constant 0 : i32
    return %c0_i32 : i32
  }
  func.func @transform_3(%arg0: i32) -> (i32, i32) {
    %c0_i32 = arith.constant 0 : i32
    %c0_i32_0 = arith.constant 0 : i32
    %c0_i32_1 = arith.constant 0 : i32
    return %c0_i32, %c0_i32_0 : i32, i32
  }
}

</mosaic_0001>

<llo_original>
// kernel: tpu_custom_call.1
$region0: #{tpu_custom_call.1}
  #allocation0 [shape = 'u32[]', space=smem, size = 0x4, offset = 0x4, fixed_abs, tag = 'smem constant byte address 0x4 - core index']
  #allocation1 [shape = 'u32[144,128]{1,0:T(1,128)}', space=vmem, size = 0x12000, scoped, tag = 'internal scratch']
  #allocation2 [shape = 'f32[1]{0:T(128)S(6)}', space=smem, size = 0x200, scoped, tag = 'scoped memory for tpu_custom_call.1']
  %s0 = inlined_call_operand.hbm [shape: f32[1,441], index: 0, kind: input, shape index: {}]
  %s1 = inlined_call_operand.hbm [shape: f32[441,384], index: 1, kind: input, shape index: {}]
  %s2 = inlined_call_operand.<no memory space> [shape: f32[1], index: 2, kind: input, shape index: {}]
  %s3 = inlined_call_operand.hbm [shape: f32[1,384], index: 3, kind: output, shape index: {}]
  %s4 = sld [smem:[#allocation0]]
  $region30: #{tpu_custom_call.1} parent=0
    _
  %s6 = ssub.s32 1, %s4
  %s7 = scalar_select 0, %s6, %s4
  %8 = sst [smem:[#allocation2]] %s2
  $region1: #{tpu_custom_call.1} parent=0
    #allocation3 [shape = 'u8[2048]{0}', space=vmem, size = 0x800, scoped, tag = 'input window, operand 0, single buffered']
    #allocation4 [shape = 's32[1]{0}', space=sflag, size = 0x4, scoped, tag = 'scoped memory for tpu_custom_call.1']
    #allocation5 [shape = 's32[1]{0}', space=sflag, size = 0x4, scoped, tag = 'scoped memory for tpu_custom_call.1']
    #allocation6 [shape = 'u8[688128]{0}', space=vmem, size = 0xa8000, scoped, tag = 'input window, operand 1, single buffered']
    #allocation7 [shape = 's32[1]{0}', space=sflag, size = 0x4, scoped, tag = 'scoped memory for tpu_custom_call.1']
    #allocation8 [shape = 'u8[1536]{0}', space=vmem, size = 0x800, scoped, tag = 'output window, operand 0, single buffered']
    %9 = vsyncpa [#allocation4], 0
    %10 = vsyncpa [#allocation7], 0
    %11 = vsyncpa [#allocation5], 0
    // Predicated region
    $region2: #{tpu_custom_call.1} parent=1 // pred_check
      _
    $region3: #{tpu_custom_call.1} parent=1 // pred_check_branch
      %13 = sbr.rel (0) target = $region5
    $region4: #{tpu_custom_call.1} parent=1 // pred_region
      %s15 = ssub.s32 64, 64
      %16 = vsyncadd [#allocation4], %s15
      %s18 = sshll.u32 [#allocation3], 4
      %s19 = int_to_ptr.vmem [resolvable:$true] %s18
      %21 = dma.hbm_to_vmem [thread:$0]  %s0, 64, %s19, [#allocation4]
    $region5: #{tpu_custom_call.1} parent=1 // pred_fallthru
      _
    // Predicated region
    $region6: #{tpu_custom_call.1} parent=1 // pred_check
      _
    $region7: #{tpu_custom_call.1} parent=1 // pred_check_branch
      %23 = sbr.rel (0) target = $region9
    $region8: #{tpu_custom_call.1} parent=1 // pred_region
      %s25 = ssub.s32 21504, 21504
      %26 = vsyncadd [#allocation7], %s25
      %s27 = sshll.u32 [#allocation6], 4
      %s28 = int_to_ptr.vmem [resolvable:$true] %s27
      %33 = dma.hbm_to_vmem [thread:$0]  %s1, 21504, %s28, [#allocation7], 384, 384, 24
    $region9: #{tpu_custom_call.1} parent=1 // pred_fallthru
      _
    // Predicated region
    $region10: #{tpu_custom_call.1} parent=1 // pred_check
      _
    $region11: #{tpu_custom_call.1} parent=1 // pred_check_branch
      %35 = sbr.rel (0) target = $region13
    $region12: #{tpu_custom_call.1} parent=1 // pred_region
      _
    $region13: #{tpu_custom_call.1} parent=1 // pred_fallthru
      _
    // Predicated region
    $region14: #{tpu_custom_call.1} parent=1 // pred_check
      _
    $region15: #{tpu_custom_call.1} parent=1 // pred_check_branch
      %37 = sbr.rel (0) target = $region17
    $region16: #{tpu_custom_call.1} parent=1 // pred_region
      %38 = dma.done [#allocation4], 64
    $region17: #{tpu_custom_call.1} parent=1 // pred_fallthru
      _
    // Predicated region
    $region18: #{tpu_custom_call.1} parent=1 // pred_check
      _
    $region19: #{tpu_custom_call.1} parent=1 // pred_check_branch
      %40 = sbr.rel (0) target = $region21
    $region20: #{tpu_custom_call.1} parent=1 // pred_region
      %41 = dma.done [#allocation7], 21504
    $region21: #{tpu_custom_call.1} parent=1 // pred_fallthru
      _
    %v42 = vld [vmem:[#allocation3] sm:$0xf]
    %v43 = vld [vmem:[#allocation6] sm:$0xff]
    %v44 = vld [vmem:[#allocation6 + $0x8] sm:$0xff]
    %v45 = vld [vmem:[#allocation6 + $0x10] sm:$0xff]
    %v46 = vld [vmem:[#allocation6 + $0x18] sm:$0xff]
    %v47 = vld [vmem:[#allocation6 + $0x20] sm:$0xff]
    %v48 = vld [vmem:[#allocation6 + $0x28] sm:$0xff]
    %v49 = vld [vmem:[#allocation6 + $0x30] sm:$0xff]
    %v50 = vld [vmem:[#allocation6 + $0x38] sm:$0xff]
    %v51 = vld [vmem:[#allocation6 + $0x40] sm:$0xff]
    %v52 = vld [vmem:[#allocation6 + $0x48] sm:$0xff]
    %v53 = vld [vmem:[#allocation6 + $0x50] sm:$0xff]
    %v54 = vld [vmem:[#allocation6 + $0x58] sm:$0xff]
    %v55 = vld [vmem:[#allocation6 + $0x60] sm:$0xff]
    %v56 = vld [vmem:[#allocation6 + $0x68] sm:$0xff]
    %v57 = vld [vmem:[#allocation6 + $0x70] sm:$0xff]
    %v58 = vld [vmem:[#allocation6 + $0x78] sm:$0xff]
    %v59 = vld [vmem:[#allocation6 + $0x80] sm:$0xff]
    %v60 = vld [vmem:[#allocation6 + $0x88] sm:$0xff]
    %v61 = vld [vmem:[#allocation6 + $0x90] sm:$0xff]
    %v62 = vld [vmem:[#allocation6 + $0x98] sm:$0xff]
    %v63 = vld [vmem:[#allocation6 + $0xa0] sm:$0xff]
    %v64 = vld [vmem:[#allocation6 + $0xa8] sm:$0xff]
    %v65 = vld [vmem:[#allocation6 + $0xb0] sm:$0xff]
    %v66 = vld [vmem:[#allocation6 + $0xb8] sm:$0xff]
    %v67 = vld [vmem:[#allocation6 + $0xc0] sm:$0xff]
    %v68 = vld [vmem:[#allocation6 + $0xc8] sm:$0xff]
    %v69 = vld [vmem:[#allocation6 + $0xd0] sm:$0xff]
    %v70 = vld [vmem:[#allocation6 + $0xd8] sm:$0xff]
    %v71 = vld [vmem:[#allocation6 + $0xe0] sm:$0xff]
    %v72 = vld [vmem:[#allocation6 + $0xe8] sm:$0xff]
    %v73 = vld [vmem:[#allocation6 + $0xf0] sm:$0xff]
    %v74 = vld [vmem:[#allocation6 + $0xf8] sm:$0xff]
    %v75 = vld [vmem:[#allocation6 + $0x100] sm:$0xff]
    %v76 = vld [vmem:[#allocation6 + $0x108] sm:$0xff]
    %v77 = vld [vmem:[#allocation6 + $0x110] sm:$0xff]
    %v78 = vld [vmem:[#allocation6 + $0x118] sm:$0xff]
    %v79 = vld [vmem:[#allocation6 + $0x120] sm:$0xff]
    %v80 = vld [vmem:[#allocation6 + $0x128] sm:$0xff]
    %v81 = vld [vmem:[#allocation6 + $0x130] sm:$0xff]
    %v82 = vld [vmem:[#allocation6 + $0x138] sm:$0xff]
    %v83 = vld [vmem:[#allocation6 + $0x140] sm:$0xff]
    %v84 = vld [vmem:[#allocation6 + $0x148] sm:$0xff]
    %v85 = vld [vmem:[#allocation6 + $0x150] sm:$0xff]
    %v86 = vld [vmem:[#allocation6 + $0x158] sm:$0xff]
    %v87 = vld [vmem:[#allocation6 + $0x160] sm:$0xff]
    %v88 = vld [vmem:[#allocation6 + $0x168] sm:$0xff]
    %v89 = vld [vmem:[#allocation6 + $0x170] sm:$0xff]
    %v90 = vld [vmem:[#allocation6 + $0x178] sm:$0xff]
    %v91 = vld [vmem:[#allocation6 + $0x180] sm:$0xff]
    %v92 = vld [vmem:[#allocation6 + $0x188] sm:$0xff]
    %v93 = vld [vmem:[#allocation6 + $0x190] sm:$0xff]
    %v94 = vld [vmem:[#allocation6 + $0x198] sm:$0xff]
    %v95 = vld [vmem:[#allocation6 + $0x1a0] sm:$0xff]
    %v96 = vld [vmem:[#allocation6 + $0x1a8] sm:$0xff]
    %v97 = vld [vmem:[#allocation6 + $0x1b0] sm:$0xff]
    %v98 = vld [vmem:[#allocation6 + $0x1b8] sm:$0xff]
    %v99 = vld [vmem:[#allocation6 + $0x1c0] sm:$0xff]
    %v100 = vld [vmem:[#allocation6 + $0x1c8] sm:$0xff]
    %v101 = vld [vmem:[#allocation6 + $0x1d0] sm:$0xff]
    %v102 = vld [vmem:[#allocation6 + $0x1d8] sm:$0xff]
    %v103 = vld [vmem:[#allocation6 + $0x1e0] sm:$0xff]
    %v104 = vld [vmem:[#allocation6 + $0x1e8] sm:$0xff]
    %v105 = vld [vmem:[#allocation6 + $0x1f0] sm:$0xff]
    %v106 = vld [vmem:[#allocation6 + $0x1f8] sm:$0xff]
    %v107 = vld [vmem:[#allocation6 + $0x200] sm:$0xff]
    %v108 = vld [vmem:[#allocation6 + $0x208] sm:$0xff]
    %v109 = vld [vmem:[#allocation6 + $0x210] sm:$0xff]
    %v110 = vld [vmem:[#allocation6 + $0x218] sm:$0xff]
    %v111 = vld [vmem:[#allocation6 + $0x220] sm:$0xff]
    %v112 = vld [vmem:[#allocation6 + $0x228] sm:$0xff]
    %v113 = vld [vmem:[#allocation6 + $0x230] sm:$0xff]
    %v114 = vld [vmem:[#allocation6 + $0x238] sm:$0xff]
    %v115 = vld [vmem:[#allocation6 + $0x240] sm:$0xff]
    %v116 = vld [vmem:[#allocation6 + $0x248] sm:$0xff]
    %v117 = vld [vmem:[#allocation6 + $0x250] sm:$0xff]
    %v118 = vld [vmem:[#allocation6 + $0x258] sm:$0xff]
    %v119 = vld [vmem:[#allocation6 + $0x260] sm:$0xff]
    %v120 = vld [vmem:[#allocation6 + $0x268] sm:$0xff]
    %v121 = vld [vmem:[#allocation6 + $0x270] sm:$0xff]
    %v122 = vld [vmem:[#allocation6 + $0x278] sm:$0xff]
    %v123 = vld [vmem:[#allocation6 + $0x280] sm:$0xff]
    %v124 = vld [vmem:[#allocation6 + $0x288] sm:$0xff]
    %v125 = vld [vmem:[#allocation6 + $0x290] sm:$0xff]
    %v126 = vld [vmem:[#allocation6 + $0x298] sm:$0xff]
    %v127 = vld [vmem:[#allocation6 + $0x2a0] sm:$0xff]
    %v128 = vld [vmem:[#allocation6 + $0x2a8] sm:$0xff]
    %v129 = vld [vmem:[#allocation6 + $0x2b0] sm:$0xff]
    %v130 = vld [vmem:[#allocation6 + $0x2b8] sm:$0xff]
    %v131 = vld [vmem:[#allocation6 + $0x2c0] sm:$0xff]
    %v132 = vld [vmem:[#allocation6 + $0x2c8] sm:$0xff]
    %v133 = vld [vmem:[#allocation6 + $0x2d0] sm:$0xff]
    %v134 = vld [vmem:[#allocation6 + $0x2d8] sm:$0xff]
    %v135 = vld [vmem:[#allocation6 + $0x2e0] sm:$0xff]
    %v136 = vld [vmem:[#allocation6 + $0x2e8] sm:$0xff]
    %v137 = vld [vmem:[#allocation6 + $0x2f0] sm:$0xff]
    %v138 = vld [vmem:[#allocation6 + $0x2f8] sm:$0xff]
    %v139 = vld [vmem:[#allocation6 + $0x300] sm:$0xff]
    %v140 = vld [vmem:[#allocation6 + $0x308] sm:$0xff]
    %v141 = vld [vmem:[#allocation6 + $0x310] sm:$0xff]
    %v142 = vld [vmem:[#allocation6 + $0x318] sm:$0xff]
    %v143 = vld [vmem:[#allocation6 + $0x320] sm:$0xff]
    %v144 = vld [vmem:[#allocation6 + $0x328] sm:$0xff]
    %v145 = vld [vmem:[#allocation6 + $0x330] sm:$0xff]
    %v146 = vld [vmem:[#allocation6 + $0x338] sm:$0xff]
    %v147 = vld [vmem:[#allocation6 + $0x340] sm:$0xff]
    %v148 = vld [vmem:[#allocation6 + $0x348] sm:$0xff]
    %v149 = vld [vmem:[#allocation6 + $0x350] sm:$0xff]
    %v150 = vld [vmem:[#allocation6 + $0x358] sm:$0xff]
    %v151 = vld [vmem:[#allocation6 + $0x360] sm:$0xff]
    %v152 = vld [vmem:[#allocation6 + $0x368] sm:$0xff]
    %v153 = vld [vmem:[#allocation6 + $0x370] sm:$0xff]
    %v154 = vld [vmem:[#allocation6 + $0x378] sm:$0xff]
    %v155 = vld [vmem:[#allocation6 + $0x380] sm:$0xff]
    %v156 = vld [vmem:[#allocation6 + $0x388] sm:$0xff]
    %v157 = vld [vmem:[#allocation6 + $0x390] sm:$0xff]
    %v158 = vld [vmem:[#allocation6 + $0x398] sm:$0xff]
    %v159 = vld [vmem:[#allocation6 + $0x3a0] sm:$0xff]
    %v160 = vld [vmem:[#allocation6 + $0x3a8] sm:$0xff]
    %v161 = vld [vmem:[#allocation6 + $0x3b0] sm:$0xff]
    %v162 = vld [vmem:[#allocation6 + $0x3b8] sm:$0xff]
    %v163 = vld [vmem:[#allocation6 + $0x3c0] sm:$0xff]
    %v164 = vld [vmem:[#allocation6 + $0x3c8] sm:$0xff]
    %v165 = vld [vmem:[#allocation6 + $0x3d0] sm:$0xff]
    %v166 = vld [vmem:[#allocation6 + $0x3d8] sm:$0xff]
    %v167 = vld [vmem:[#allocation6 + $0x3e0] sm:$0xff]
    %v168 = vld [vmem:[#allocation6 + $0x3e8] sm:$0xff]
    %v169 = vld [vmem:[#allocation6 + $0x3f0] sm:$0xff]
    %v170 = vld [vmem:[#allocation6 + $0x3f8] sm:$0xff]
    %v171 = vld [vmem:[#allocation6 + $0x400] sm:$0xff]
    %v172 = vld [vmem:[#allocation6 + $0x408] sm:$0xff]
    %v173 = vld [vmem:[#allocation6 + $0x410] sm:$0xff]
    %v174 = vld [vmem:[#allocation6 + $0x418] sm:$0xff]
    %v175 = vld [vmem:[#allocation6 + $0x420] sm:$0xff]
    %v176 = vld [vmem:[#allocation6 + $0x428] sm:$0xff]
    %v177 = vld [vmem:[#allocation6 + $0x430] sm:$0xff]
    %v178 = vld [vmem:[#allocation6 + $0x438] sm:$0xff]
    %v179 = vld [vmem:[#allocation6 + $0x440] sm:$0xff]
    %v180 = vld [vmem:[#allocation6 + $0x448] sm:$0xff]
    %v181 = vld [vmem:[#allocation6 + $0x450] sm:$0xff]
    %v182 = vld [vmem:[#allocation6 + $0x458] sm:$0xff]
    %v183 = vld [vmem:[#allocation6 + $0x460] sm:$0xff]
    %v184 = vld [vmem:[#allocation6 + $0x468] sm:$0xff]
    %v185 = vld [vmem:[#allocation6 + $0x470] sm:$0xff]
    %v186 = vld [vmem:[#allocation6 + $0x478] sm:$0xff]
    %v187 = vld [vmem:[#allocation6 + $0x480] sm:$0xff]
    %v188 = vld [vmem:[#allocation6 + $0x488] sm:$0xff]
    %v189 = vld [vmem:[#allocation6 + $0x490] sm:$0xff]
    %v190 = vld [vmem:[#allocation6 + $0x498] sm:$0xff]
    %v191 = vld [vmem:[#allocation6 + $0x4a0] sm:$0xff]
    %v192 = vld [vmem:[#allocation6 + $0x4a8] sm:$0xff]
    %v193 = vld [vmem:[#allocation6 + $0x4b0] sm:$0xff]
    %v194 = vld [vmem:[#allocation6 + $0x4b8] sm:$0xff]
    %v195 = vld [vmem:[#allocation6 + $0x4c0] sm:$0xff]
    %v196 = vld [vmem:[#allocation6 + $0x4c8] sm:$0xff]
    %v197 = vld [vmem:[#allocation6 + $0x4d0] sm:$0xff]
    %v198 = vld [vmem:[#allocation6 + $0x4d8] sm:$0xff]
    %v199 = vld [vmem:[#allocation6 + $0x4e0] sm:$0xff]
    %v200 = vld [vmem:[#allocation6 + $0x4e8] sm:$0xff]
    %v201 = vld [vmem:[#allocation6 + $0x4f0] sm:$0xff]
    %v202 = vld [vmem:[#allocation6 + $0x4f8] sm:$0xff]
    %v203 = vld [vmem:[#allocation6 + $0x500] sm:$0xff]
    %v204 = vld [vmem:[#allocation6 + $0x508] sm:$0xff]
    %v205 = vld [vmem:[#allocation6 + $0x510] sm:$0xff]
    %v206 = vld [vmem:[#allocation6 + $0x518] sm:$0xff]
    %v207 = vld [vmem:[#allocation6 + $0x520] sm:$0xff]
    %v208 = vld [vmem:[#allocation6 + $0x528] sm:$0x1]
    %v209 = vld [vmem:[#allocation6 + $0x530] sm:$0x1]
    %v210 = vld [vmem:[#allocation6 + $0x538] sm:$0x1]
    %s211 = sld [smem:[#allocation2]]
    %v212 = vstv %s211
    %v214 = vlaneseq
    %v215 = vshrl.u32 %v214, 7
    %v216 = vsub.s32 0, %v215
    %v217 = vrot.slane %v42, %v216
    %v218 = vlaneseq
    %v219 = vshrl.u32 %v218, 7
    %v220 = vsub.s32 1, %v219
    %v221 = vrot.slane %v42, %v220
    %v222 = vlaneseq
    %v223 = vshrl.u32 %v222, 7
    %v224 = vsub.s32 2, %v223
    %v225 = vrot.slane %v42, %v224
    %v226 = vlaneseq
    %v227 = vshrl.u32 %v226, 7
    %v228 = vsub.s32 3, %v227
    %v229 = vrot.slane %v42, %v228
    %vm233 = vcmask 465920
    %v234 = vsel %vm233, %v229, 0
    %vm236 = vcmask 1040384
    %v238 = vsel %vm236, %v208, 0
    %v241 = vsel %vm236, %v209, 0
    %v244 = vsel %vm236, %v210, 0
    %246 = vmatprep.subr.mxu0 %v44
    %247 = vmatpush1.msra.mxu0 %v43
    %248 = vmatprep.subr.mxu0 %v47
    %249 = vmatpush1.msra.mxu0 %v46
    %250 = vmatprep.subr.mxu0 %v50
    %251 = vmatpush1.msra.mxu0 %v49
    %252 = vmatprep.subr.mxu0 %v53
    %253 = vmatpush1.msra.mxu0 %v52
    %254 = vmatprep.subr.mxu0 %v56
    %255 = vmatpush1.msra.mxu0 %v55
    %256 = vmatprep.subr.mxu0 %v59
    %257 = vmatpush1.msra.mxu0 %v58
    %258 = vmatprep.subr.mxu0 %v62
    %259 = vmatpush1.msra.mxu0 %v61
    %260 = vmatprep.subr.mxu0 %v65
    %261 = vmatpush1.msra.mxu0 %v64
    %262 = vmatprep.subr.mxu0 %v68
    %263 = vmatpush1.msra.mxu0 %v67
    %264 = vmatprep.subr.mxu0 %v71
    %265 = vmatpush1.msra.mxu0 %v70
    %266 = vmatprep.subr.mxu0 %v74
    %267 = vmatpush1.msra.mxu0 %v73
    %268 = vmatprep.subr.mxu0 %v77
    %269 = vmatpush1.msra.mxu0 %v76
    %270 = vmatprep.subr.mxu0 %v80
    %271 = vmatpush1.msra.mxu0 %v79
    %272 = vmatprep.subr.mxu0 %v83
    %273 = vmatpush1.msra.mxu0 %v82
    %274 = vmatprep.subr.mxu0 %v86
    %275 = vmatpush1.msra.mxu0 %v85
    %276 = vmatprep.subr.mxu0 %v89
    %277 = vmatpush1.msra.mxu0 %v88
    %278 = vmatprep.subr.mxu0 %v92
    %279 = vmatpush1.msra.mxu0 %v91
    %280 = vmatprep.subr.mxu0 %v95
    %281 = vmatpush1.msra.mxu0 %v94
    %282 = vmatprep.subr.mxu0 %v98
    %283 = vmatpush1.msra.mxu0 %v97
    %284 = vmatprep.subr.mxu0 %v101
    %285 = vmatpush1.msra.mxu0 %v100
    %286 = vmatprep.subr.mxu0 %v104
    %287 = vmatpush1.msra.mxu0 %v103
    %288 = vmatprep.subr.mxu0 %v107
    %289 = vmatpush1.msra.mxu0 %v106
    %290 = vmatprep.subr.mxu0 %v110
    %291 = vmatpush1.msra.mxu0 %v109
    %292 = vmatprep.subr.mxu0 %v113
    %293 = vmatpush1.msra.mxu0 %v112
    %294 = vmatprep.subr.mxu0 %v116
    %295 = vmatpush1.msra.mxu0 %v115
    %296 = vmatprep.subr.mxu0 %v119
    %297 = vmatpush1.msra.mxu0 %v118
    %298 = vmatprep.subr.mxu0 %v122
    %299 = vmatpush1.msra.mxu0 %v121
    %300 = vmatprep.subr.mxu0 %v125
    %301 = vmatpush1.msra.mxu0 %v124
    %302 = vmatprep.subr.mxu0 %v128
    %303 = vmatpush1.msra.mxu0 %v127
    %304 = vmatprep.subr.mxu0 %v131
    %305 = vmatpush1.msra.mxu0 %v130
    %306 = vmatprep.subr.mxu0 %v134
    %307 = vmatpush1.msra.mxu0 %v133
    %308 = vmatprep.subr.mxu0 %v137
    %309 = vmatpush1.msra.mxu0 %v136
    %310 = vmatprep.mubr.f32.mxu0 %v221
    %311 = vmatmul.mubr.f32.gmra.mrb[0].mxu0 %v217
    %v312 = vpop.f32.mrb[0].mxu0
    %v313 = vadd.f32 %v212, %v312
    %v314 = vpop.f32.mrb[0].mxu0
    %v315 = vadd.f32 %v212, %v314
    %316 = vdwg.mxu0
    %317 = vmatprep.subr.mxu0 %v140
    %318 = vmatpush1.msra.mxu0 %v139
    %319 = vmatprep.subr.mxu0 %v143
    %320 = vmatpush1.msra.mxu0 %v142
    %321 = vmatprep.subr.mxu0 %v146
    %322 = vmatpush1.msra.mxu0 %v145
    %323 = vmatprep.subr.mxu0 %v149
    %324 = vmatpush1.msra.mxu0 %v148
    %325 = vmatprep.subr.mxu0 %v152
    %326 = vmatpush1.msra.mxu0 %v151
    %327 = vmatprep.subr.mxu0 %v155
    %328 = vmatpush1.msra.mxu0 %v154
    %329 = vmatprep.subr.mxu0 %v158
    %330 = vmatpush1.msra.mxu0 %v157
    %331 = vmatprep.subr.mxu0 %v161
    %332 = vmatpush1.msra.mxu0 %v160
    %333 = vmatprep.subr.mxu0 %v164
    %334 = vmatpush1.msra.mxu0 %v163
    %335 = vmatprep.subr.mxu0 %v167
    %336 = vmatpush1.msra.mxu0 %v166
    %337 = vmatprep.subr.mxu0 %v170
    %338 = vmatpush1.msra.mxu0 %v169
    %339 = vmatprep.subr.mxu0 %v173
    %340 = vmatpush1.msra.mxu0 %v172
    %341 = vmatprep.subr.mxu0 %v176
    %342 = vmatpush1.msra.mxu0 %v175
    %343 = vmatprep.subr.mxu0 %v179
    %344 = vmatpush1.msra.mxu0 %v178
    %345 = vmatprep.subr.mxu0 %v182
    %346 = vmatpush1.msra.mxu0 %v181
    %347 = vmatprep.subr.mxu0 %v185
    %348 = vmatpush1.msra.mxu0 %v184
    %349 = vmatprep.subr.mxu0 %v188
    %350 = vmatpush1.msra.mxu0 %v187
    %351 = vmatprep.subr.mxu0 %v191
    %352 = vmatpush1.msra.mxu0 %v190
    %353 = vmatprep.subr.mxu0 %v194
    %354 = vmatpush1.msra.mxu0 %v193
    %355 = vmatprep.subr.mxu0 %v197
    %356 = vmatpush1.msra.mxu0 %v196
    %357 = vmatprep.subr.mxu0 %v200
    %358 = vmatpush1.msra.mxu0 %v199
    %359 = vmatprep.subr.mxu0 %v203
    %360 = vmatpush1.msra.mxu0 %v202
    %361 = vmatprep.subr.mxu0 %v206
    %362 = vmatpush1.msra.mxu0 %v205
    %363 = vmatprep.subr.mxu0 %v241
    %364 = vmatpush1.msra.mxu0 %v238
    %365 = vmatprep.subr.mxu0 0.0
    %366 = vmatpush1.msra.mxu0 0.0
    %367 = vmatprep.subr.mxu0 0.0
    %368 = vmatpush1.msra.mxu0 0.0
    %369 = vmatprep.subr.mxu0 0.0
    %370 = vmatpush1.msra.mxu0 0.0
    %371 = vmatprep.subr.mxu0 0.0
    %372 = vmatpush1.msra.mxu0 0.0
    %373 = vmatprep.subr.mxu0 0.0
    %374 = vmatpush1.msra.mxu0 0.0
    %375 = vmatprep.subr.mxu0 0.0
    %376 = vmatpush1.msra.mxu0 0.0
    %377 = vmatprep.subr.mxu0 0.0
    %378 = vmatpush1.msra.mxu0 0.0
    %379 = vmatprep.subr.mxu0 0.0
    %380 = vmatpush1.msra.mxu0 0.0
    %381 = vmatprep.mubr.f32.mxu0 %v234
    %382 = vmatmul.mubr.f32.gmra.mrb[0].mxu0 %v225
    %v383 = vpop.f32.mrb[0].mxu0
    %v384 = vadd.f32 %v313, %v383
    %v385 = vpop.f32.mrb[0].mxu0
    %v386 = vadd.f32 %v315, %v385
    %387 = vdwg.mxu0
    %388 = vmatprep.subr.mxu0 0.0
    %389 = vmatpush1.msra.mxu0 %v45
    %390 = vmatprep.subr.mxu0 0.0
    %391 = vmatpush1.msra.mxu0 %v48
    %392 = vmatprep.subr.mxu0 0.0
    %393 = vmatpush1.msra.mxu0 %v51
    %394 = vmatprep.subr.mxu0 0.0
    %395 = vmatpush1.msra.mxu0 %v54
    %396 = vmatprep.subr.mxu0 0.0
    %397 = vmatpush1.msra.mxu0 %v57
    %398 = vmatprep.subr.mxu0 0.0
    %399 = vmatpush1.msra.mxu0 %v60
    %400 = vmatprep.subr.mxu0 0.0
    %401 = vmatpush1.msra.mxu0 %v63
    %402 = vmatprep.subr.mxu0 0.0
    %403 = vmatpush1.msra.mxu0 %v66
    %404 = vmatprep.subr.mxu0 0.0
    %405 = vmatpush1.msra.mxu0 %v69
    %406 = vmatprep.subr.mxu0 0.0
    %407 = vmatpush1.msra.mxu0 %v72
    %408 = vmatprep.subr.mxu0 0.0
    %409 = vmatpush1.msra.mxu0 %v75
    %410 = vmatprep.subr.mxu0 0.0
    %411 = vmatpush1.msra.mxu0 %v78
    %412 = vmatprep.subr.mxu0 0.0
    %413 = vmatpush1.msra.mxu0 %v81
    %414 = vmatprep.subr.mxu0 0.0
    %415 = vmatpush1.msra.mxu0 %v84
    %416 = vmatprep.subr.mxu0 0.0
    %417 = vmatpush1.msra.mxu0 %v87
    %418 = vmatprep.subr.mxu0 0.0
    %419 = vmatpush1.msra.mxu0 %v90
    %420 = vmatprep.subr.mxu0 0.0
    %421 = vmatpush1.msra.mxu0 %v93
    %422 = vmatprep.subr.mxu0 0.0
    %423 = vmatpush1.msra.mxu0 %v96
    %424 = vmatprep.subr.mxu0 0.0
    %425 = vmatpush1.msra.mxu0 %v99
    %426 = vmatprep.subr.mxu0 0.0
    %427 = vmatpush1.msra.mxu0 %v102
    %428 = vmatprep.subr.mxu0 0.0
    %429 = vmatpush1.msra.mxu0 %v105
    %430 = vmatprep.subr.mxu0 0.0
    %431 = vmatpush1.msra.mxu0 %v108
    %432 = vmatprep.subr.mxu0 0.0
    %433 = vmatpush1.msra.mxu0 %v111
    %434 = vmatprep.subr.mxu0 0.0
    %435 = vmatpush1.msra.mxu0 %v114
    %436 = vmatprep.subr.mxu0 0.0
    %437 = vmatpush1.msra.mxu0 %v117
    %438 = vmatprep.subr.mxu0 0.0
    %439 = vmatpush1.msra.mxu0 %v120
    %440 = vmatprep.subr.mxu0 0.0
    %441 = vmatpush1.msra.mxu0 %v123
    %442 = vmatprep.subr.mxu0 0.0
    %443 = vmatpush1.msra.mxu0 %v126
    %444 = vmatprep.subr.mxu0 0.0
    %445 = vmatpush1.msra.mxu0 %v129
    %446 = vmatprep.subr.mxu0 0.0
    %447 = vmatpush1.msra.mxu0 %v132
    %448 = vmatprep.subr.mxu0 0.0
    %449 = vmatpush1.msra.mxu0 %v135
    %450 = vmatprep.subr.mxu0 0.0
    %451 = vmatpush1.msra.mxu0 %v138
    %452 = vmatprep.mubr.f32.mxu0 %v221
    %453 = vmatmul.mubr.f32.gmra.mrb[0].mxu0 %v217
    %v454 = vpop.f32.mrb[0].mxu0
    %v455 = vadd.f32 %v212, %v454
    %v456 = vpop.f32.mrb[0].mxu0
    %457 = vdwg.mxu0
    %458 = vmatprep.subr.mxu0 0.0
    %459 = vmatpush1.msra.mxu0 %v141
    %460 = vmatprep.subr.mxu0 0.0
    %461 = vmatpush1.msra.mxu0 %v144
    %462 = vmatprep.subr.mxu0 0.0
    %463 = vmatpush1.msra.mxu0 %v147
    %464 = vmatprep.subr.mxu0 0.0
    %465 = vmatpush1.msra.mxu0 %v150
    %466 = vmatprep.subr.mxu0 0.0
    %467 = vmatpush1.msra.mxu0 %v153
    %468 = vmatprep.subr.mxu0 0.0
    %469 = vmatpush1.msra.mxu0 %v156
    %470 = vmatprep.subr.mxu0 0.0
    %471 = vmatpush1.msra.mxu0 %v159
    %472 = vmatprep.subr.mxu0 0.0
    %473 = vmatpush1.msra.mxu0 %v162
    %474 = vmatprep.subr.mxu0 0.0
    %475 = vmatpush1.msra.mxu0 %v165
    %476 = vmatprep.subr.mxu0 0.0
    %477 = vmatpush1.msra.mxu0 %v168
    %478 = vmatprep.subr.mxu0 0.0
    %479 = vmatpush1.msra.mxu0 %v171
    %480 = vmatprep.subr.mxu0 0.0
    %481 = vmatpush1.msra.mxu0 %v174
    %482 = vmatprep.subr.mxu0 0.0
    %483 = vmatpush1.msra.mxu0 %v177
    %484 = vmatprep.subr.mxu0 0.0
    %485 = vmatpush1.msra.mxu0 %v180
    %486 = vmatprep.subr.mxu0 0.0
    %487 = vmatpush1.msra.mxu0 %v183
    %488 = vmatprep.subr.mxu0 0.0
    %489 = vmatpush1.msra.mxu0 %v186
    %490 = vmatprep.subr.mxu0 0.0
    %491 = vmatpush1.msra.mxu0 %v189
    %492 = vmatprep.subr.mxu0 0.0
    %493 = vmatpush1.msra.mxu0 %v192
    %494 = vmatprep.subr.mxu0 0.0
    %495 = vmatpush1.msra.mxu0 %v195
    %496 = vmatprep.subr.mxu0 0.0
    %497 = vmatpush1.msra.mxu0 %v198
    %498 = vmatprep.subr.mxu0 0.0
    %499 = vmatpush1.msra.mxu0 %v201
    %500 = vmatprep.subr.mxu0 0.0
    %501 = vmatpush1.msra.mxu0 %v204
    %502 = vmatprep.subr.mxu0 0.0
    %503 = vmatpush1.msra.mxu0 %v207
    %504 = vmatprep.subr.mxu0 0.0
    %505 = vmatpush1.msra.mxu0 %v244
    %506 = vmatprep.subr.mxu0 0.0
    %507 = vmatpush1.msra.mxu0 0.0
    %508 = vmatprep.subr.mxu0 0.0
    %509 = vmatpush1.msra.mxu0 0.0
    %510 = vmatprep.subr.mxu0 0.0
    %511 = vmatpush1.msra.mxu0 0.0
    %512 = vmatprep.subr.mxu0 0.0
    %513 = vmatpush1.msra.mxu0 0.0
    %514 = vmatprep.subr.mxu0 0.0
    %515 = vmatpush1.msra.mxu0 0.0
    %516 = vmatprep.subr.mxu0 0.0
    %517 = vmatpush1.msra.mxu0 0.0
    %518 = vmatprep.subr.mxu0 0.0
    %519 = vmatpush1.msra.mxu0 0.0
    %520 = vmatprep.subr.mxu0 0.0
    %521 = vmatpush1.msra.mxu0 0.0
    %522 = vmatprep.mubr.f32.mxu0 %v234
    %523 = vmatmul.mubr.f32.gmra.mrb[0].mxu0 %v225
    %v524 = vpop.f32.mrb[0].mxu0
    %v525 = vadd.f32 %v455, %v524
    %v526 = vpop.f32.mrb[0].mxu0
    %527 = vdwg.mxu0
    %v528 = vmax.f32 %v384, 0.0
    %v529 = vmax.f32 %v386, 0.0
    %v530 = vmax.f32 %v525, 0.0
    %v531 = vmul.f32 %v528, 0.01
    %v532 = vmul.f32 %v529, 0.01
    %v533 = vmul.f32 %v530, 0.01
    %v534 = vsub.f32 %v531, 0.001
    %v535 = vsub.f32 %v532, 0.001
    %v536 = vsub.f32 %v533, 0.001
    %v537 = vmax.f32 %v534, 0.0
    %v538 = vmax.f32 %v535, 0.0
    %v539 = vmax.f32 %v536, 0.0
    %v543 = vcombine.low %v537, %v538
    %v545 = vunpack.c.l.s4 1966171168
    %v546 = vunpack.c.0.s8 %v545
    %v547 = vlaneseq
    %v548 = vshrl.u32 %v547, 7
    %v549 = vsub.s32 %v546, %v548
    %v550 = vrot.slane %v543, %v549
    %v552 = vunpack.c.l.s4 1966171168
    %v553 = vunpack.c.0.s8 %v552
    %v554 = vlaneseq
    %v555 = vshrl.u32 %v554, 7
    %v556 = vsub.s32 %v553, %v555
    %v557 = vrot.slane %v539, %v556
    %v558 = vcombine.low %v550, %v557
    %v560 = vunpack.c.l.s4 1966171168
    %v561 = vunpack.c.0.s8 %v560
    %v562 = vlaneseq
    %v563 = vshrl.u32 %v562, 7
    %v564 = vsub.s32 %v561, %v563
    %v565 = vrot.slane %v558, %v564
    %v567 = vlaneseq
    %vm568 = vcmp.ge.s32.totalorder %v567, 0
    %vm569 = vcmp.lt.s32.totalorder %v567, 384
    %vm570 = vmand %vm568, %vm569
    %571 = vst.msk [vmem:[#allocation8] sm:$0x7] %vm570, %v565
    // Predicated region
    $region22: #{tpu_custom_call.1} parent=1 // pred_check
      _
    $region23: #{tpu_custom_call.1} parent=1 // pred_check_branch
      %573 = sbr.rel (0) target = $region25
    $region24: #{tpu_custom_call.1} parent=1 // pred_region
      %s575 = ssub.s32 48, 48
      %576 = vsyncadd [#allocation5], %s575
      %s578 = sshll.u32 [#allocation8], 4
      %s579 = int_to_ptr.vmem [resolvable:$true] %s578
      %581 = dma.vmem_to_hbm [thread:$0]  %s579, 48, %s3, [#allocation5]
    $region25: #{tpu_custom_call.1} parent=1 // pred_fallthru
      _
    // Predicated region
    $region26: #{tpu_custom_call.1} parent=1 // pred_check
      _
    $region27: #{tpu_custom_call.1} parent=1 // pred_check_branch
      %583 = sbr.rel (0) target = $region29
    $region28: #{tpu_custom_call.1} parent=1 // pred_region
      %584 = dma.done [#allocation5], 48
    $region29: #{tpu_custom_call.1} parent=1 // pred_fallthru
      _
    %585 = vsyncpa [#allocation4], 1
    %586 = vsyncpa [#allocation7], 1
    %587 = vsyncpa [#allocation5], 1

</llo_original>
